<compile_context>
chip_gen: v7x
topology: tpu7x:2x2x1
jax: 0.10.0
libtpu: 0.0.40
codegen_flags: <defaults>
</compile_context>

<pallas_src>
import functools
import math

import jax
import jax.numpy as jnp
from jax.experimental import pallas as pl
from jax.experimental.pallas import tpu as pltpu

NUM_SUBTASKS = 16
LEAKY_SLOPE = 0.01          # nn.LeakyReLU default negative_slope
_TB_MAX = 1024              # per-grid-step row cap (VMEM use stays tiny)


def _leaky_relu(x):
    return jnp.where(x >= 0, x, LEAKY_SLOPE * x)


def _round_up(v, m):
    return ((v + m - 1) // m) * m


# --------------------------------------------------------------------------
# Fused Pallas kernel:
#   linear_a -> linear_a1 -> linear_a2 -> linear_b -> log_softmax
# with shared-LHS matmuls fused into 4 dots via packed weight slabs.
# --------------------------------------------------------------------------

def subtask_predictor_kernel(x_ref, win_ref, wh_ref, b3_ref, bb_ref, out_ref,
                             *, hidden, num_subtasks):
    h, nst = hidden, num_subtasks

    x = x_ref[...]                                   # [TB, in_pad]  bf16
    b3 = b3_ref[...]                                 # [3, h]        f32

    # ---- x1 = act(linear_a(x)) ------------------------------------------
    x1 = _leaky_relu(
        jnp.dot(x, win_ref[...], preferred_element_type=jnp.float32)
        + b3[0:1, :])                                # [TB, h]  f32

    # ---- fused dot from x1: [a1 pre | a2(x1) | logits(x1)] ---------------
    y1 = jnp.dot(x1.astype(jnp.bfloat16), wh_ref[0:h, :],
                 preferred_element_type=jnp.float32)          # [TB, 2h+nst]

    # ---- x2 = act(linear_a1(x1)) -----------------------------------------
    x2 = _leaky_relu(y1[:, 0:h] + b3[1:2, :])                 # [TB, h]

    # ---- fused dot from x2: [a2(x2) | logits(x2)] ------------------------
    y2 = jnp.dot(x2.astype(jnp.bfloat16), wh_ref[h:2 * h, 0:h + nst],
                 preferred_element_type=jnp.float32)          # [TB, h+nst]

    # ---- x3 = act(linear_a2(cat([x1, x2]))) -- concat replaced by sums ---
    x3 = _leaky_relu(y1[:, h:2 * h] + y2[:, 0:h] + b3[2:3, :])  # [TB, h]

    # ---- logits(x3) -------------------------------------------------------
    y3 = jnp.dot(x3.astype(jnp.bfloat16), wh_ref[2 * h:3 * h, 0:nst],
                 preferred_element_type=jnp.float32)          # [TB, nst]

    # logits = linear_b(cat([x1, x2, x3])) -- concat replaced by split sums
    logits = (y1[:, 2 * h:2 * h + nst]
              + y2[:, h:h + nst]
              + y3
              + bb_ref[...])                                  # [TB, nst] f32

    # ---- log_softmax(dim=1), numerically stable, in f32 -------------------
    m = jnp.max(logits, axis=-1, keepdims=True)
    s = logits - m
    out_ref[...] = s - jnp.log(jnp.sum(jnp.exp(s), axis=-1, keepdims=True))


# --------------------------------------------------------------------------
# Wrapper: param packing (pre-transpose + slab fusion, done once per call)
# --------------------------------------------------------------------------

def pack_params(params):
    """Pack torch-layout (out,in) weights into two bf16 slabs + f32 biases.

    Slab 1 (w_in)  : [in_pad, h]            -> W_a^T (zero-padded rows)
    Slab 2 (w_h)   : [3h, 2h+nst], rows:
        0:h    -> [W_a1^T | W_a2[:, :h]^T | W_b[:, :h]^T]      (LHS = x1)
        h:2h   -> [W_a2[:, h:]^T | W_b[:, h:2h]^T | 0]         (LHS = x2)
        2h:3h  -> [W_b[:, 2h:]^T | 0 | 0]                      (LHS = x3)
    """
    wa, wa1, wa2, wb = params["wa"], params["wa1"], params["wa2"], params["wb"]
    h = wa.shape[0]
    input_size = wa.shape[1]
    nst = wb.shape[0]
    assert h % 8 == 0, "hidden_size must be a multiple of 8 (sublane-aligned slab rows)"

    in_pad = _round_up(input_size, 8)
    w_in = jnp.zeros((in_pad, h), jnp.float32).at[:input_size, :].set(wa.T)

    wcols = 2 * h + nst
    w_h = jnp.zeros((3 * h, wcols), jnp.float32)
    # x1 rows
    w_h = w_h.at[0:h, 0:h].set(wa1.T)
    w_h = w_h.at[0:h, h:2 * h].set(wa2[:, :h].T)
    w_h = w_h.at[0:h, 2 * h:2 * h + nst].set(wb[:, :h].T)
    # x2 rows
    w_h = w_h.at[h:2 * h, 0:h].set(wa2[:, h:].T)
    w_h = w_h.at[h:2 * h, h:h + nst].set(wb[:, h:2 * h].T)
    # x3 rows
    w_h = w_h.at[2 * h:3 * h, 0:nst].set(wb[:, 2 * h:].T)

    b3 = jnp.stack([params["ba"], params["ba1"], params["ba2"]], axis=0)  # (3, h)
    bb = params["bb"][None, :]                                            # (1, nst)

    return (w_in.astype(jnp.bfloat16), w_h.astype(jnp.bfloat16),
            b3.astype(jnp.float32), bb.astype(jnp.float32),
            input_size, in_pad, h, nst)


def _choose_row_block(batch):
    """Largest sublane-aligned row tile <= _TB_MAX that keeps >= 2 grid steps
    when the batch allows it (both v7x TensorCores busy), amortizing the
    ~0.35us per-grid-step overhead."""
    b8 = _round_up(max(batch, 1), 8)
    tb = min(_TB_MAX, _round_up(-(-b8 // 2), 8))
    return max(tb, 8)


def subtask_predictor_forward(params, x):
    B = x.shape[0]
    w_in, w_h, b3, bb, input_size, in_pad, hidden, nst = pack_params(params)
    assert x.shape[1] == input_size, (x.shape, input_size)

    tb = _choose_row_block(B)
    b_pad = _round_up(B, tb)

    # Pad batch/feature dims and cast the MXU operand to bf16 (halves x HBM read).
    xb = jnp.pad(x.astype(jnp.bfloat16),
                 ((0, b_pad - B), (0, in_pad - input_size)))

    kernel = functools.partial(subtask_predictor_kernel,
                               hidden=hidden, num_subtasks=nst)

    flops = 2 * b_pad * (in_pad * hidden
                         + hidden * (2 * hidden + nst)
                         + hidden * (hidden + nst)
                         + hidden * nst)
    bytes_accessed = (b_pad * in_pad * 2          # x (bf16)
                      + w_in.size * 2 + w_h.size * 2
                      + b3.size * 4 + bb.size * 4
                      + b_pad * nst * 4)          # output (f32)

    out = pl.pallas_call(
        kernel,
        out_shape=jax.ShapeDtypeStruct((b_pad, nst), jnp.float32),
        grid=(b_pad // tb,),
        in_specs=[
            pl.BlockSpec((tb, in_pad), lambda i: (i, 0)),   # x (batched rows)
            pl.BlockSpec(w_in.shape, lambda i: (0, 0)),     # W_a^T slab
            pl.BlockSpec(w_h.shape, lambda i: (0, 0)),      # fused hidden slab
            pl.BlockSpec(b3.shape, lambda i: (0, 0)),       # biases a/a1/a2
            pl.BlockSpec(bb.shape, lambda i: (0, 0)),       # bias b
        ],
        out_specs=pl.BlockSpec((tb, nst), lambda i: (i, 0)),
        compiler_params=pltpu.CompilerParams(
            dimension_semantics=("parallel",)),             # megacore-shard batch
        cost_estimate=pl.CostEstimate(
            flops=int(flops),
            transcendentals=int(b_pad * (nst + 1)),
            bytes_accessed=int(bytes_accessed)),
    )(xb, w_in, w_h, b3, bb)
    return out[:B]


def subtask_predictor_forward_embedding(params, env_embeddings,
                                        subtask_history_embeddings):
    # forward_embedding == forward on cat([env, history], dim=1); concat in wrapper.
    x = jnp.concatenate([env_embeddings, subtask_history_embeddings], axis=1)
    return subtask_predictor_forward(params, x)


# --------------------------------------------------------------------------
# Deterministic parameter init (shapes follow the PyTorch __init__)
# --------------------------------------------------------------------------

def init_params(key, hidden, input_size, num_subtasks=NUM_SUBTASKS):
    ks = jax.random.split(key, 8)

    def lin(kw, kb, out_dim, in_dim):
        bound = 1.0 / math.sqrt(in_dim)
        w = jax.random.uniform(kw, (out_dim, in_dim), jnp.float32, -bound, bound)
        b = jax.random.uniform(kb, (out_dim,), jnp.float32, -bound, bound)
        return w, b

    wa, ba = lin(ks[0], ks[1], hidden, input_size)           # linear_a
    wa1, ba1 = lin(ks[2], ks[3], hidden, hidden)             # linear_a1
    wa2, ba2 = lin(ks[4], ks[5], hidden, 2 * hidden)         # linear_a2
    wb, bb = lin(ks[6], ks[7], num_subtasks, 3 * hidden)     # linear_b
    return dict(wa=wa, ba=ba, wa1=wa1, ba1=ba1,
                wa2=wa2, ba2=ba2, wb=wb, bb=bb)


# --------------------------------------------------------------------------
# Pure-JAX f32 reference (matches the PyTorch forward)
# --------------------------------------------------------------------------

def reference_forward(params, x):
    act = _leaky_relu
    x1 = act(x @ params["wa"].T + params["ba"])
    x2 = act(x1 @ params["wa1"].T + params["ba1"])
    x12 = jnp.concatenate([x1, x2], axis=-1)
    x3 = act(x12 @ params["wa2"].T + params["ba2"])
    x123 = jnp.concatenate([x1, x2, x3], axis=-1)
    logits = x123 @ params["wb"].T + params["bb"]
    return jax.nn.log_softmax(logits, axis=1)


if __name__ == "__main__":
    HIDDEN = 32
    INPUT_SIZE = 2 * HIDDEN      # default: input_size = hidden_size * 2
    B = 8

    key = jax.random.PRNGKey(0)
    pkey, xkey, ekey, hkey = jax.random.split(key, 4)
    params = init_params(pkey, HIDDEN, INPUT_SIZE, NUM_SUBTASKS)
    x = jax.random.normal(xkey, (B, INPUT_SIZE), jnp.float32)

    out = jax.block_until_ready(subtask_predictor_forward(params, x))

    assert out.shape == (B, NUM_SUBTASKS), out.shape
    assert bool(jnp.all(jnp.isfinite(out)))

    # log_softmax rows must exponentiate-sum to 1
    row_sums = jnp.sum(jnp.exp(out), axis=-1)
    assert bool(jnp.all(jnp.abs(row_sums - 1.0) < 1e-3)), row_sums

    # Compare against pure-f32 reference. Tolerance is loose because the MXU
    # operands are bf16 (f32 accumulation); at hidden=32 the error stays small.
    ref = reference_forward(params, x)
    max_err = float(jnp.max(jnp.abs(out - ref)))
    assert max_err < 5e-2, max_err

    # forward_embedding path (concat done in the wrapper)
    env = jax.random.normal(ekey, (B, HIDDEN), jnp.float32)
    hist = jax.random.normal(hkey, (B, HIDDEN), jnp.float32)
    out_e = jax.block_until_ready(
        subtask_predictor_forward_embedding(params, env, hist))
    ref_e = reference_forward(params, jnp.concatenate([env, hist], axis=1))
    max_err_e = float(jnp.max(jnp.abs(out_e - ref_e)))
    assert out_e.shape == (B, NUM_SUBTASKS)
    assert max_err_e < 5e-2, max_err_e

    print("KERNEL_OK")
</pallas_src>

<mosaic_0001>
module attributes {stable_mosaic.version = 11 : i64} {
  func.func @subtask_predictor_kernel(%arg0: i32, %arg1: memref<8x64xbf16, #tpu.memory_space<vmem>>, %arg2: memref<64x32xbf16, #tpu.memory_space<vmem>>, %arg3: memref<96x80xbf16, #tpu.memory_space<vmem>>, %arg4: memref<3x32xf32, #tpu.memory_space<vmem>>, %arg5: memref<1x16xf32, #tpu.memory_space<vmem>>, %arg6: memref<8x16xf32, #tpu.memory_space<vmem>>) attributes {dimension_semantics = [#tpu.dimension_semantics<parallel>], iteration_bounds = array<i64: 1>, scalar_prefetch = 0 : i64, scratch_operands = 0 : i64, tpu.core_type = #tpu.core_type<tc>, window_params = [{transform_indices = @transform_0, window_bounds = array<i64: 8, 64>}, {pipeline_mode = #tpu.pipeline_mode<synchronous>, transform_indices = @transform_1, window_bounds = array<i64: 64, 32>}, {pipeline_mode = #tpu.pipeline_mode<synchronous>, transform_indices = @transform_2, window_bounds = array<i64: 96, 80>}, {pipeline_mode = #tpu.pipeline_mode<synchronous>, transform_indices = @transform_3, window_bounds = array<i64: 3, 32>}, {pipeline_mode = #tpu.pipeline_mode<synchronous>, transform_indices = @transform_4, window_bounds = array<i64: 1, 16>}, {transform_indices = @transform_5, window_bounds = array<i64: 8, 16>}]} {
    %c0 = arith.constant 0 : index
    %c0_0 = arith.constant 0 : index
    %0 = vector.load %arg1[%c0, %c0_0] : memref<8x64xbf16, #tpu.memory_space<vmem>>, vector<8x64xbf16>
    %c0_1 = arith.constant 0 : index
    %c0_2 = arith.constant 0 : index
    %1 = vector.load %arg4[%c0_1, %c0_2] : memref<3x32xf32, #tpu.memory_space<vmem>>, vector<3x32xf32>
    %c0_3 = arith.constant 0 : index
    %c0_4 = arith.constant 0 : index
    %2 = vector.load %arg2[%c0_3, %c0_4] : memref<64x32xbf16, #tpu.memory_space<vmem>>, vector<64x32xbf16>
    %cst = arith.constant dense<0.000000e+00> : vector<8x32xf32>
    %3 = tpu.matmul %0, %2, %cst {dimension_numbers = #tpu.dot_dimension_numbers<[1], [0], [0], [1], [0, 0, 1, 1], [], []>} : vector<8x64xbf16>, vector<64x32xbf16>, vector<8x32xf32> -> vector<8x32xf32>
    %4 = vector.extract_strided_slice %1 {offsets = [0, 0], sizes = [1, 32], strides = [1, 1]} : vector<3x32xf32> to vector<1x32xf32>
    %5 = vector.broadcast %4 : vector<1x32xf32> to vector<8x32xf32>
    %6 = arith.addf %3, %5 : vector<8x32xf32>
    %cst_5 = arith.constant 0.000000e+00 : f32
    %7 = vector.broadcast %cst_5 : f32 to vector<8x32xf32>
    %8 = arith.cmpf oge, %6, %7 : vector<8x32xf32>
    %cst_6 = arith.constant 0.00999999977 : f32
    %9 = vector.broadcast %cst_6 : f32 to vector<8x32xf32>
    %10 = arith.mulf %9, %6 : vector<8x32xf32>
    %11 = arith.select %8, %6, %10 : vector<8x32xi1>, vector<8x32xf32>
    %12 = arith.truncf %11 : vector<8x32xf32> to vector<8x32xbf16>
    %c0_7 = arith.constant 0 : index
    %c0_8 = arith.constant 0 : index
    %13 = vector.load %arg3[%c0_7, %c0_8] : memref<96x80xbf16, #tpu.memory_space<vmem>>, vector<32x80xbf16>
    %cst_9 = arith.constant dense<0.000000e+00> : vector<8x80xf32>
    %14 = tpu.matmul %12, %13, %cst_9 {dimension_numbers = #tpu.dot_dimension_numbers<[1], [0], [0], [1], [0, 0, 1, 1], [], []>} : vector<8x32xbf16>, vector<32x80xbf16>, vector<8x80xf32> -> vector<8x80xf32>
    %15 = vector.extract_strided_slice %14 {offsets = [0, 0], sizes = [8, 32], strides = [1, 1]} : vector<8x80xf32> to vector<8x32xf32>
    %16 = vector.extract_strided_slice %1 {offsets = [1, 0], sizes = [1, 32], strides = [1, 1]} : vector<3x32xf32> to vector<1x32xf32>
    %17 = vector.broadcast %16 : vector<1x32xf32> to vector<8x32xf32>
    %18 = arith.addf %15, %17 : vector<8x32xf32>
    %cst_10 = arith.constant 0.000000e+00 : f32
    %19 = vector.broadcast %cst_10 : f32 to vector<8x32xf32>
    %20 = arith.cmpf oge, %18, %19 : vector<8x32xf32>
    %cst_11 = arith.constant 0.00999999977 : f32
    %21 = vector.broadcast %cst_11 : f32 to vector<8x32xf32>
    %22 = arith.mulf %21, %18 : vector<8x32xf32>
    %23 = arith.select %20, %18, %22 : vector<8x32xi1>, vector<8x32xf32>
    %24 = arith.truncf %23 : vector<8x32xf32> to vector<8x32xbf16>
    %c32 = arith.constant 32 : index
    %c0_12 = arith.constant 0 : index
    %25 = vector.load %arg3[%c32, %c0_12] : memref<96x80xbf16, #tpu.memory_space<vmem>>, vector<32x48xbf16>
    %cst_13 = arith.constant dense<0.000000e+00> : vector<8x48xf32>
    %26 = tpu.matmul %24, %25, %cst_13 {dimension_numbers = #tpu.dot_dimension_numbers<[1], [0], [0], [1], [0, 0, 1, 1], [], []>} : vector<8x32xbf16>, vector<32x48xbf16>, vector<8x48xf32> -> vector<8x48xf32>
    %27 = vector.extract_strided_slice %14 {offsets = [0, 32], sizes = [8, 32], strides = [1, 1]} : vector<8x80xf32> to vector<8x32xf32>
    %28 = vector.extract_strided_slice %26 {offsets = [0, 0], sizes = [8, 32], strides = [1, 1]} : vector<8x48xf32> to vector<8x32xf32>
    %29 = arith.addf %27, %28 : vector<8x32xf32>
    %30 = vector.extract_strided_slice %1 {offsets = [2, 0], sizes = [1, 32], strides = [1, 1]} : vector<3x32xf32> to vector<1x32xf32>
    %31 = vector.broadcast %30 : vector<1x32xf32> to vector<8x32xf32>
    %32 = arith.addf %29, %31 : vector<8x32xf32>
    %cst_14 = arith.constant 0.000000e+00 : f32
    %33 = vector.broadcast %cst_14 : f32 to vector<8x32xf32>
    %34 = arith.cmpf oge, %32, %33 : vector<8x32xf32>
    %cst_15 = arith.constant 0.00999999977 : f32
    %35 = vector.broadcast %cst_15 : f32 to vector<8x32xf32>
    %36 = arith.mulf %35, %32 : vector<8x32xf32>
    %37 = arith.select %34, %32, %36 : vector<8x32xi1>, vector<8x32xf32>
    %38 = arith.truncf %37 : vector<8x32xf32> to vector<8x32xbf16>
    %c64 = arith.constant 64 : index
    %c0_16 = arith.constant 0 : index
    %39 = vector.load %arg3[%c64, %c0_16] : memref<96x80xbf16, #tpu.memory_space<vmem>>, vector<32x16xbf16>
    %cst_17 = arith.constant dense<0.000000e+00> : vector<8x16xf32>
    %40 = tpu.matmul %38, %39, %cst_17 {dimension_numbers = #tpu.dot_dimension_numbers<[1], [0], [0], [1], [0, 0, 1, 1], [], []>} : vector<8x32xbf16>, vector<32x16xbf16>, vector<8x16xf32> -> vector<8x16xf32>
    %41 = vector.extract_strided_slice %14 {offsets = [0, 64], sizes = [8, 16], strides = [1, 1]} : vector<8x80xf32> to vector<8x16xf32>
    %42 = vector.extract_strided_slice %26 {offsets = [0, 32], sizes = [8, 16], strides = [1, 1]} : vector<8x48xf32> to vector<8x16xf32>
    %43 = arith.addf %41, %42 : vector<8x16xf32>
    %44 = arith.addf %43, %40 : vector<8x16xf32>
    %c0_18 = arith.constant 0 : index
    %c0_19 = arith.constant 0 : index
    %45 = vector.load %arg5[%c0_18, %c0_19] : memref<1x16xf32, #tpu.memory_space<vmem>>, vector<1x16xf32>
    %46 = vector.broadcast %45 : vector<1x16xf32> to vector<8x16xf32>
    %47 = arith.addf %44, %46 : vector<8x16xf32>
    %cst_20 = arith.constant dense<0xFF800000> : vector<8xf32>
    %48 = vector.multi_reduction <maximumf>, %47, %cst_20 [1] : vector<8x16xf32> to vector<8xf32>
    %49 = vector.shape_cast %48 : vector<8xf32> to vector<8x1xf32>
    %50 = vector.broadcast %49 : vector<8x1xf32> to vector<8x16xf32>
    %51 = arith.subf %47, %50 : vector<8x16xf32>
    %52 = math.exp %51 : vector<8x16xf32>
    %cst_21 = arith.constant dense<0.000000e+00> : vector<8xf32>
    %53 = vector.multi_reduction <add>, %52, %cst_21 [1] : vector<8x16xf32> to vector<8xf32>
    %54 = vector.shape_cast %53 : vector<8xf32> to vector<8x1xf32>
    %55 = math.log %54 : vector<8x1xf32>
    %56 = vector.broadcast %55 : vector<8x1xf32> to vector<8x16xf32>
    %57 = arith.subf %51, %56 : vector<8x16xf32>
    %c0_22 = arith.constant 0 : index
    %c0_23 = arith.constant 0 : index
    %58 = vector.load %arg6[%c0_22, %c0_23] : memref<8x16xf32, #tpu.memory_space<vmem>>, vector<8x16xf32>
    tpu.vector_store %arg6[%c0_22, %c0_23], %57 {strides = array<i32>} : memref<8x16xf32, #tpu.memory_space<vmem>>, vector<8x16xf32>,
    return
  }
  func.func @transform_0(%arg0: i32) -> (i32, i32) {
    %c0_i32 = arith.constant 0 : i32
    %c0_i32_0 = arith.constant 0 : i32
    return %arg0, %c0_i32 : i32, i32
  }
  func.func @transform_1(%arg0: i32) -> (i32, i32) {
    %c0_i32 = arith.constant 0 : i32
    %c0_i32_0 = arith.constant 0 : i32
    %c0_i32_1 = arith.constant 0 : i32
    return %c0_i32, %c0_i32_0 : i32, i32
  }
  func.func @transform_2(%arg0: i32) -> (i32, i32) {
    %c0_i32 = arith.constant 0 : i32
    %c0_i32_0 = arith.constant 0 : i32
    %c0_i32_1 = arith.constant 0 : i32
    return %c0_i32, %c0_i32_0 : i32, i32
  }
  func.func @transform_3(%arg0: i32) -> (i32, i32) {
    %c0_i32 = arith.constant 0 : i32
    %c0_i32_0 = arith.constant 0 : i32
    %c0_i32_1 = arith.constant 0 : i32
    return %c0_i32, %c0_i32_0 : i32, i32
  }
  func.func @transform_4(%arg0: i32) -> (i32, i32) {
    %c0_i32 = arith.constant 0 : i32
    %c0_i32_0 = arith.constant 0 : i32
    %c0_i32_1 = arith.constant 0 : i32
    return %c0_i32, %c0_i32_0 : i32, i32
  }
  func.func @transform_5(%arg0: i32) -> (i32, i32) {
    %c0_i32 = arith.constant 0 : i32
    %c0_i32_0 = arith.constant 0 : i32
    return %arg0, %c0_i32 : i32, i32
  }
}

</mosaic_0001>

<llo_original>
// kernel: tpu_custom_call.1
$region0: #{tpu_custom_call.1}
  #allocation0 [shape = 'u32[]', space=smem, size = 0x4, offset = 0x4, fixed_abs, tag = 'smem constant byte address 0x4 - core index']
  #allocation1 [shape = 'u32[144,128]{1,0:T(1,128)}', space=vmem, size = 0x12000, scoped, tag = 'internal scratch']
  %s0 = inlined_call_operand.vmem [shape: bf16[8,64], index: 0, kind: input, shape index: {}]
  %s1 = inlined_call_operand.vmem [shape: bf16[64,32], index: 1, kind: input, shape index: {}]
  %s2 = inlined_call_operand.vmem [shape: bf16[96,80], index: 2, kind: input, shape index: {}]
  %s3 = inlined_call_operand.vmem [shape: f32[3,32], index: 3, kind: input, shape index: {}]
  %s4 = inlined_call_operand.vmem [shape: f32[1,16], index: 4, kind: input, shape index: {}]
  %s5 = inlined_call_operand.hbm [shape: f32[8,16], index: 5, kind: output, shape index: {}]
  %s6 = sld [smem:[#allocation0]]
  $region30: #{tpu_custom_call.1} parent=0
    _
  %s8 = ssub.s32 1, %s6
  %s9 = scalar_select 0, %s8, %s6
  $region1: #{tpu_custom_call.1} parent=0
    #allocation2 [shape = 'u8[4096]{0}', space=vmem, size = 0x1000, scoped, tag = 'output window, operand 0, single buffered']
    #allocation3 [shape = 's32[1]{0}', space=sflag, size = 0x4, scoped, tag = 'scoped memory for tpu_custom_call.1']
    %10 = vsyncpa [#allocation3], 0
    // Predicated region
    $region2: #{tpu_custom_call.1} parent=1 // pred_check
      _
    $region3: #{tpu_custom_call.1} parent=1 // pred_check_branch
      %12 = sbr.rel (0) target = $region5
    $region4: #{tpu_custom_call.1} parent=1 // pred_region
      _
    $region5: #{tpu_custom_call.1} parent=1 // pred_fallthru
      _
    // Predicated region
    $region6: #{tpu_custom_call.1} parent=1 // pred_check
      _
    $region7: #{tpu_custom_call.1} parent=1 // pred_check_branch
      %14 = sbr.rel (0) target = $region9
    $region8: #{tpu_custom_call.1} parent=1 // pred_region
      _
    $region9: #{tpu_custom_call.1} parent=1 // pred_fallthru
      _
    // Predicated region
    $region10: #{tpu_custom_call.1} parent=1 // pred_check
      _
    $region11: #{tpu_custom_call.1} parent=1 // pred_check_branch
      %16 = sbr.rel (0) target = $region13
    $region12: #{tpu_custom_call.1} parent=1 // pred_region
      _
    $region13: #{tpu_custom_call.1} parent=1 // pred_fallthru
      _
    // Predicated region
    $region14: #{tpu_custom_call.1} parent=1 // pred_check
      _
    $region15: #{tpu_custom_call.1} parent=1 // pred_check_branch
      %18 = sbr.rel (0) target = $region17
    $region16: #{tpu_custom_call.1} parent=1 // pred_region
      _
    $region17: #{tpu_custom_call.1} parent=1 // pred_fallthru
      _
    // Predicated region
    $region18: #{tpu_custom_call.1} parent=1 // pred_check
      _
    $region19: #{tpu_custom_call.1} parent=1 // pred_check_branch
      %20 = sbr.rel (0) target = $region21
    $region20: #{tpu_custom_call.1} parent=1 // pred_region
      _
    $region21: #{tpu_custom_call.1} parent=1 // pred_fallthru
      _
    %v22 = vld [vmem:[%s0] sm:$0xf]
    %v23 = vld [vmem:[%s3] sm:$0x7]
    %v24 = vld [vmem:[%s1] sm:$0xf]
    %v25 = vld [vmem:[%s1 + $0x4] sm:$0xf]
    %v26 = vld [vmem:[%s1 + $0x8] sm:$0xf]
    %v27 = vld [vmem:[%s1 + $0xc] sm:$0xf]
    %v28 = vld [vmem:[%s1 + $0x10] sm:$0xf]
    %v29 = vld [vmem:[%s1 + $0x14] sm:$0xf]
    %v30 = vld [vmem:[%s1 + $0x18] sm:$0xf]
    %v31 = vld [vmem:[%s1 + $0x1c] sm:$0xf]
    %v32 = vlaneseq
    %v33 = vshrl.u32 %v32, 7
    %v34 = vsub.s32 0, %v33
    %v35 = vrot.slane %v23, %v34
    %v44 = vunpack.c.l.b16 %v24
    %v45 = vunpack.c.l.b16 %v25
    %v46 = vunpack.c.l.b16 %v26
    %v47 = vunpack.c.l.b16 %v27
    %v48 = vunpack.c.l.b16 %v28
    %v49 = vunpack.c.l.b16 %v29
    %v50 = vunpack.c.l.b16 %v30
    %v51 = vunpack.c.l.b16 %v31
    %v52 = vpack.c.b16 %v45, %v44
    %v53 = vpack.c.b16 %v47, %v46
    %v54 = vpack.c.b16 %v49, %v48
    %v55 = vpack.c.b16 %v51, %v50
    %vm60 = vcmask 523264
    %v62 = vsel %vm60, %v22, 0
    %64 = vmatprep.subr.bf16.mxu0 0
    %65 = vmatpush1.bf16.msra.mxu0 %v52
    %66 = vmatprep.subr.bf16.mxu0 0
    %67 = vmatpush1.bf16.msra.mxu0 %v53
    %68 = vmatprep.subr.bf16.mxu0 0
    %69 = vmatpush1.bf16.msra.mxu0 %v54
    %70 = vmatprep.subr.bf16.mxu0 0
    %71 = vmatpush1.bf16.msra.mxu0 %v55
    %72 = vmatprep.subr.bf16.mxu0 0
    %73 = vmatpush1.bf16.msra.mxu0 0
    %74 = vmatprep.subr.bf16.mxu0 0
    %75 = vmatpush1.bf16.msra.mxu0 0
    %76 = vmatprep.subr.bf16.mxu0 0
    %77 = vmatpush1.bf16.msra.mxu0 0
    %78 = vmatprep.subr.bf16.mxu0 0
    %79 = vmatpush1.bf16.msra.mxu0 0
    %80 = vmatprep.subr.bf16.mxu0 0
    %81 = vmatpush1.bf16.msra.mxu0 0
    %82 = vmatprep.subr.bf16.mxu0 0
    %83 = vmatpush1.bf16.msra.mxu0 0
    %84 = vmatprep.subr.bf16.mxu0 0
    %85 = vmatpush1.bf16.msra.mxu0 0
    %86 = vmatprep.subr.bf16.mxu0 0
    %87 = vmatpush1.bf16.msra.mxu0 0
    %88 = vmatprep.subr.bf16.mxu0 0
    %89 = vmatpush1.bf16.msra.mxu0 0
    %90 = vmatprep.subr.bf16.mxu0 0
    %91 = vmatpush1.bf16.msra.mxu0 0
    %92 = vmatprep.subr.bf16.mxu0 0
    %93 = vmatpush1.bf16.msra.mxu0 0
    %94 = vmatprep.subr.bf16.mxu0 0
    %95 = vmatpush1.bf16.msra.mxu0 0
    %96 = vmatprep.mubr.bf16.mxu0 0
    %97 = vmatmul.mubr.bf16.gmra.mrb[0].mxu0 %v62
    %v98 = vpop.f32.mrb[0].mxu0
    %v99 = vadd.f32 %v35, %v98
    %v100 = vpop.f32.mrb[0].mxu0
    %v101 = vpop.f32.mrb[0].mxu0
    %v102 = vpop.f32.mrb[0].mxu0
    %103 = vdwg.mxu0
    %vm104 = vcmp.ge.f32.partialorder %v99, 0.0
    %v105 = vmul.f32 %v99, 0.01
    %v106 = vsel %vm104, %v99, %v105
    %v107 = vpack.c.bf16 %v106, %v106
    %v108 = vld [vmem:[%s2] sm:$0xf]
    %v109 = vld [vmem:[%s2 + $0x4] sm:$0xf]
    %v110 = vld [vmem:[%s2 + $0x8] sm:$0xf]
    %v111 = vld [vmem:[%s2 + $0xc] sm:$0xf]
    %v116 = vunpack.c.l.b16 %v108
    %v117 = vunpack.c.l.b16 %v109
    %v118 = vunpack.c.l.b16 %v110
    %v119 = vunpack.c.l.b16 %v111
    %v120 = vpack.c.b16 %v117, %v116
    %v121 = vpack.c.b16 %v119, %v118
    %vm124 = vcmask 261120
    %v126 = vsel %vm124, %v107, 0
    %128 = vmatprep.subr.bf16.mxu0 0
    %129 = vmatpush1.bf16.msra.mxu0 %v120
    %130 = vmatprep.subr.bf16.mxu0 0
    %131 = vmatpush1.bf16.msra.mxu0 %v121
    %132 = vmatprep.subr.bf16.mxu0 0
    %133 = vmatpush1.bf16.msra.mxu0 0
    %134 = vmatprep.subr.bf16.mxu0 0
    %135 = vmatpush1.bf16.msra.mxu0 0
    %136 = vmatprep.subr.bf16.mxu0 0
    %137 = vmatpush1.bf16.msra.mxu0 0
    %138 = vmatprep.subr.bf16.mxu0 0
    %139 = vmatpush1.bf16.msra.mxu0 0
    %140 = vmatprep.subr.bf16.mxu0 0
    %141 = vmatpush1.bf16.msra.mxu0 0
    %142 = vmatprep.subr.bf16.mxu0 0
    %143 = vmatpush1.bf16.msra.mxu0 0
    %144 = vmatprep.subr.bf16.mxu0 0
    %145 = vmatpush1.bf16.msra.mxu0 0
    %146 = vmatprep.subr.bf16.mxu0 0
    %147 = vmatpush1.bf16.msra.mxu0 0
    %148 = vmatprep.subr.bf16.mxu0 0
    %149 = vmatpush1.bf16.msra.mxu0 0
    %150 = vmatprep.subr.bf16.mxu0 0
    %151 = vmatpush1.bf16.msra.mxu0 0
    %152 = vmatprep.subr.bf16.mxu0 0
    %153 = vmatpush1.bf16.msra.mxu0 0
    %154 = vmatprep.subr.bf16.mxu0 0
    %155 = vmatpush1.bf16.msra.mxu0 0
    %156 = vmatprep.subr.bf16.mxu0 0
    %157 = vmatpush1.bf16.msra.mxu0 0
    %158 = vmatprep.subr.bf16.mxu0 0
    %159 = vmatpush1.bf16.msra.mxu0 0
    %160 = vmatprep.mubr.bf16.mxu0 0
    %161 = vmatmul.mubr.bf16.gmra.mrb[0].mxu0 %v126
    %v162 = vpop.f32.mrb[0].mxu0
    %v163 = vadd.f32 0.0, %v162
    %v164 = vpop.f32.mrb[0].mxu0
    %v165 = vpop.f32.mrb[0].mxu0
    %v166 = vpop.f32.mrb[0].mxu0
    %167 = vdwg.mxu0
    %v168 = vlaneseq
    %v169 = vshrl.u32 %v168, 7
    %v170 = vsub.s32 1, %v169
    %v171 = vrot.slane %v23, %v170
    %v172 = vadd.f32 %v163, %v171
    %vm173 = vcmp.ge.f32.partialorder %v172, 0.0
    %v174 = vmul.f32 %v172, 0.01
    %v175 = vsel %vm173, %v172, %v174
    %v176 = vpack.c.bf16 %v175, %v175
    %v177 = vld [vmem:[%s2 + $0x10] sm:$0xf]
    %v178 = vld [vmem:[%s2 + $0x14] sm:$0xf]
    %v179 = vld [vmem:[%s2 + $0x18] sm:$0xf]
    %v180 = vld [vmem:[%s2 + $0x1c] sm:$0xf]
    %v185 = vunpack.c.l.b16 %v177
    %v186 = vunpack.c.l.b16 %v178
    %v187 = vunpack.c.l.b16 %v179
    %v188 = vunpack.c.l.b16 %v180
    %v189 = vpack.c.b16 %v186, %v185
    %v190 = vpack.c.b16 %v188, %v187
    %v194 = vsel %vm124, %v176, 0
    %196 = vmatprep.subr.bf16.mxu0 0
    %197 = vmatpush1.bf16.msra.mxu0 %v189
    %198 = vmatprep.subr.bf16.mxu0 0
    %199 = vmatpush1.bf16.msra.mxu0 %v190
    %200 = vmatprep.subr.bf16.mxu0 0
    %201 = vmatpush1.bf16.msra.mxu0 0
    %202 = vmatprep.subr.bf16.mxu0 0
    %203 = vmatpush1.bf16.msra.mxu0 0
    %204 = vmatprep.subr.bf16.mxu0 0
    %205 = vmatpush1.bf16.msra.mxu0 0
    %206 = vmatprep.subr.bf16.mxu0 0
    %207 = vmatpush1.bf16.msra.mxu0 0
    %208 = vmatprep.subr.bf16.mxu0 0
    %209 = vmatpush1.bf16.msra.mxu0 0
    %210 = vmatprep.subr.bf16.mxu0 0
    %211 = vmatpush1.bf16.msra.mxu0 0
    %212 = vmatprep.subr.bf16.mxu0 0
    %213 = vmatpush1.bf16.msra.mxu0 0
    %214 = vmatprep.subr.bf16.mxu0 0
    %215 = vmatpush1.bf16.msra.mxu0 0
    %216 = vmatprep.subr.bf16.mxu0 0
    %217 = vmatpush1.bf16.msra.mxu0 0
    %218 = vmatprep.subr.bf16.mxu0 0
    %219 = vmatpush1.bf16.msra.mxu0 0
    %220 = vmatprep.subr.bf16.mxu0 0
    %221 = vmatpush1.bf16.msra.mxu0 0
    %222 = vmatprep.subr.bf16.mxu0 0
    %223 = vmatpush1.bf16.msra.mxu0 0
    %224 = vmatprep.subr.bf16.mxu0 0
    %225 = vmatpush1.bf16.msra.mxu0 0
    %226 = vmatprep.subr.bf16.mxu0 0
    %227 = vmatpush1.bf16.msra.mxu0 0
    %228 = vmatprep.mubr.bf16.mxu0 0
    %229 = vmatmul.mubr.bf16.gmra.mrb[0].mxu0 %v194
    %v230 = vpop.f32.mrb[0].mxu0
    %v231 = vadd.f32 0.0, %v230
    %v232 = vpop.f32.mrb[0].mxu0
    %v233 = vpop.f32.mrb[0].mxu0
    %v234 = vpop.f32.mrb[0].mxu0
    %235 = vdwg.mxu0
    %237 = vrot.lane.b32.xlu0 %v231, 32
    %v238 = vpop.permute.xlu0 %237
    %v240 = vadd.f32 %v163, %v238
    %v241 = vlaneseq
    %v242 = vshrl.u32 %v241, 7
    %v243 = vsub.s32 2, %v242
    %v244 = vrot.slane %v23, %v243
    %246 = vrot.lane.b32.xlu0 %v244, 32
    %v247 = vpop.permute.xlu0 %246
    %v249 = vadd.f32 %v240, %v247
    %vm250 = vcmp.ge.f32.partialorder %v249, 0.0
    %v251 = vmul.f32 %v249, 0.01
    %v252 = vsel %vm250, %v249, %v251
    %v253 = vpack.c.bf16 %v252, %v252
    %v254 = vld [vmem:[%s2 + $0x20] sm:$0xf]
    %v255 = vld [vmem:[%s2 + $0x24] sm:$0xf]
    %v256 = vld [vmem:[%s2 + $0x28] sm:$0xf]
    %v257 = vld [vmem:[%s2 + $0x2c] sm:$0xf]
    %259 = vrot.lane.b32.xlu0 %v253, 96
    %v260 = vpop.permute.xlu0 %259
    %v265 = vunpack.c.l.b16 %v254
    %v266 = vunpack.c.l.b16 %v255
    %v267 = vunpack.c.l.b16 %v256
    %v268 = vunpack.c.l.b16 %v257
    %v269 = vpack.c.b16 %v266, %v265
    %v270 = vpack.c.b16 %v268, %v267
    %v274 = vsel %vm124, %v260, 0
    %276 = vmatprep.subr.bf16.mxu0 0
    %277 = vmatpush1.bf16.msra.mxu0 %v269
    %278 = vmatprep.subr.bf16.mxu0 0
    %279 = vmatpush1.bf16.msra.mxu0 %v270
    %280 = vmatprep.subr.bf16.mxu0 0
    %281 = vmatpush1.bf16.msra.mxu0 0
    %282 = vmatprep.subr.bf16.mxu0 0
    %283 = vmatpush1.bf16.msra.mxu0 0
    %284 = vmatprep.subr.bf16.mxu0 0
    %285 = vmatpush1.bf16.msra.mxu0 0
    %286 = vmatprep.subr.bf16.mxu0 0
    %287 = vmatpush1.bf16.msra.mxu0 0
    %288 = vmatprep.subr.bf16.mxu0 0
    %289 = vmatpush1.bf16.msra.mxu0 0
    %290 = vmatprep.subr.bf16.mxu0 0
    %291 = vmatpush1.bf16.msra.mxu0 0
    %292 = vmatprep.subr.bf16.mxu0 0
    %293 = vmatpush1.bf16.msra.mxu0 0
    %294 = vmatprep.subr.bf16.mxu0 0
    %295 = vmatpush1.bf16.msra.mxu0 0
    %296 = vmatprep.subr.bf16.mxu0 0
    %297 = vmatpush1.bf16.msra.mxu0 0
    %298 = vmatprep.subr.bf16.mxu0 0
    %299 = vmatpush1.bf16.msra.mxu0 0
    %300 = vmatprep.subr.bf16.mxu0 0
    %301 = vmatpush1.bf16.msra.mxu0 0
    %302 = vmatprep.subr.bf16.mxu0 0
    %303 = vmatpush1.bf16.msra.mxu0 0
    %304 = vmatprep.subr.bf16.mxu0 0
    %305 = vmatpush1.bf16.msra.mxu0 0
    %306 = vmatprep.subr.bf16.mxu0 0
    %307 = vmatpush1.bf16.msra.mxu0 0
    %308 = vmatprep.mubr.bf16.mxu0 0
    %309 = vmatmul.mubr.bf16.gmra.mrb[0].mxu0 %v274
    %v310 = vpop.f32.mrb[0].mxu0
    %v311 = vadd.f32 0.0, %v310
    %v312 = vpop.f32.mrb[0].mxu0
    %v313 = vpop.f32.mrb[0].mxu0
    %v314 = vpop.f32.mrb[0].mxu0
    %315 = vdwg.mxu0
    %317 = vrot.lane.b32.xlu0 %v311, 64
    %v318 = vpop.permute.xlu0 %317
    %v320 = vadd.f32 %v240, %v318
    %v321 = vld [vmem:[%s4] sm:$0x1]
    %v323 = vlaneseq
    %v324 = vshrl.u32 %v323, 7
    %v325 = vsub.s32 0, %v324
    %v326 = vrot.slane %v321, %v325
    %327 = vrot.lane.b32.xlu0 %v326, 64
    %v328 = vpop.permute.xlu0 %327
    %v330 = vadd.f32 %v320, %v328
    %vm331 = vcmask 654848
    %v332 = vsel %vm331, %v330, -inf
    %333 = vmax.xlane.f32.xlu0 %v332
    %v334 = vpop.xlane.xlu0 %333
    %v335 = vsub.f32 %v330, %v334
    %v336 = vmul.f32 %v335, 1.442695
    %v337 = vpow.pop %v336
    %339 = vrot.lane.b32.xlu0 %v337, 64
    %v340 = vpop.permute.xlu0 %339
    %vm342 = vcmask 130048
    %v343 = vsel %vm342, %v340, 0.0
    %344 = vadd.xlane.f32.xlu0 %v343
    %v345 = vpop.xlane.xlu0 %344
    %v346 = vlog2.pop %v345
    %v347 = vmul.f32 %v346, 0.6931472
    %v348 = vsub.f32 %v335, %v347
    %350 = vrot.lane.b32.xlu0 %v348, 64
    %v351 = vpop.permute.xlu0 %350
    %353 = vst.msk [vmem:[#allocation2] sm:$0xff] %vm342, %v351
    // Predicated region
    $region22: #{tpu_custom_call.1} parent=1 // pred_check
      _
    $region23: #{tpu_custom_call.1} parent=1 // pred_check_branch
      %355 = sbr.rel (0) target = $region25
    $region24: #{tpu_custom_call.1} parent=1 // pred_region
      %s357 = ssub.s32 128, 128
      %358 = vsyncadd [#allocation3], %s357
      %s360 = sshll.u32 [#allocation2], 4
      %s361 = int_to_ptr.vmem [resolvable:$true] %s360
      %363 = dma.vmem_to_hbm [thread:$0]  %s361, 128, %s5, [#allocation3]
    $region25: #{tpu_custom_call.1} parent=1 // pred_fallthru
      _
    // Predicated region
    $region26: #{tpu_custom_call.1} parent=1 // pred_check
      _
    $region27: #{tpu_custom_call.1} parent=1 // pred_check_branch
      %365 = sbr.rel (0) target = $region29
    $region28: #{tpu_custom_call.1} parent=1 // pred_region
      %366 = dma.done [#allocation3], 128
    $region29: #{tpu_custom_call.1} parent=1 // pred_fallthru
      _
    %367 = vsyncpa [#allocation3], 1

</llo_original>
